<compile_context>
chip_gen: v6e
topology: v6e:2x2x1
jax: 0.10.0
libtpu: 0.0.40
codegen_flags: <defaults>
</compile_context>

<pallas_src>
import jax
import jax.numpy as jnp
from jax.experimental import pallas as pl
from jax.experimental.pallas import tpu as pltpu


def _linear_kernel(x_ref, w_ref, b_ref, o_ref):
    # x_ref: (TILE_B, 1), w_ref: (1, TILE_N), b_ref: (1, TILE_N), o_ref: (TILE_B, TILE_N)
    # Pure VPU broadcast multiply-add (no MXU for a degenerate K=1 contraction).
    o_ref[...] = x_ref[...] * w_ref[...] + b_ref[...]


def _round_up(x, m):
    return ((x + m - 1) // m) * m


def _vmem_limit_bytes():
    # Per-generation scoped-VMEM limit: ~48 MiB on v5e/v6e (128 MiB physical),
    # ~40 MiB on v7x (64 MiB physical). Conservative fallback if query fails.
    try:
        phys = int(pltpu.get_tpu_info().vmem_capacity_bytes)
    except Exception:
        phys = 64 * 1024 * 1024
    return int(min(48 * 1024 * 1024, max(16 * 1024 * 1024, (phys * 5) // 8)))


def opt_network_forward(state, weight, bias):
    """Pallas implementation of opt_network.forward (== torch.nn.Linear(1, n_hid)).

    state:  (B, 1)      float32
    weight: (n_hid, 1)  float32   (PyTorch Linear weight layout)
    bias:   (n_hid,)    float32
    returns (B, n_hid)  float32
    """
    B = state.shape[0]
    n_hid = weight.shape[0]

    x = state.astype(jnp.float32)
    w_row = weight.reshape(1, n_hid).astype(jnp.float32)  # contiguous -> free relayout
    b_row = bias.reshape(1, n_hid).astype(jnp.float32)

    # ---- VMEM accounting (all sizes include TPU lane/sublane padding) --------
    vmem_limit = _vmem_limit_bytes()
    budget = vmem_limit - 2 * 1024 * 1024          # headroom for internal scratch
    n_lanes = _round_up(n_hid, 128)                # last dim pads to 128 lanes in VMEM
    # w + b rows: (1, n_hid) -> (8, n_lanes) f32 each, double-buffered.
    fixed = 2 * 2 * 8 * n_lanes * 4
    # per batch row, double-buffered: output row (n_lanes f32) + x row (pads to 128 lanes).
    per_row = 2 * 4 * (n_lanes + 128)

    cost_est = pl.CostEstimate(
        flops=2 * B * n_hid,
        transcendentals=0,
        bytes_accessed=4 * (B * n_hid + B + 2 * n_hid),
    )

    if fixed + 8 * per_row <= budget:
        # ---- common case: 1-D grid over batch, weight/bias resident ----------
        max_rows = max(8, (((budget - fixed) // per_row) // 8) * 8)

        if B <= max(8, min(max_rows, 1024)):
            tile_b = B                              # single full-dim block: no pad, no slice
        else:
            steps = max(2, pl.cdiv(B, max_rows))
            if steps % 2:                           # even split across the 2 TCs on v7x
                steps += 1
            tile_b = min(max_rows, _round_up(pl.cdiv(B, steps), 8))

        grid = (pl.cdiv(B, tile_b),)                # edge block (if any) is masked on store

        out = pl.pallas_call(
            _linear_kernel,
            out_shape=jax.ShapeDtypeStruct((B, n_hid), jnp.float32),
            grid=grid,
            in_specs=[
                pl.BlockSpec((tile_b, 1), lambda i: (i, 0)),   # batch tile of state
                pl.BlockSpec((1, n_hid), lambda i: (0, 0)),    # weight row (resident)
                pl.BlockSpec((1, n_hid), lambda i: (0, 0)),    # bias row (resident)
            ],
            out_specs=pl.BlockSpec((tile_b, n_hid), lambda i: (i, 0)),
            compiler_params=pltpu.CompilerParams(
                dimension_semantics=("parallel",),
                vmem_limit_bytes=vmem_limit,
            ),
            cost_estimate=cost_est,
        )(x, w_row, b_row)
        return out

    # ---- extreme-width fallback: tile n_hid too (rare; robustness only) ------
    tile_b = min(512, max(8, _round_up(min(B, 256), 8)))
    denom = 8 * (tile_b + 16)                       # bytes per n-lane (out + w + b, x2 buf)
    tile_n = max(128, (((budget - 8 * tile_b * 128) // denom) // 128) * 128)
    grid = (pl.cdiv(B, tile_b), pl.cdiv(n_hid, tile_n))

    out = pl.pallas_call(
        _linear_kernel,
        out_shape=jax.ShapeDtypeStruct((B, n_hid), jnp.float32),
        grid=grid,
        in_specs=[
            pl.BlockSpec((tile_b, 1), lambda i, j: (i, 0)),
            pl.BlockSpec((1, tile_n), lambda i, j: (0, j)),
            pl.BlockSpec((1, tile_n), lambda i, j: (0, j)),
        ],
        out_specs=pl.BlockSpec((tile_b, tile_n), lambda i, j: (i, j)),
        compiler_params=pltpu.CompilerParams(
            dimension_semantics=("parallel", "parallel"),
            vmem_limit_bytes=vmem_limit,
        ),
        cost_estimate=cost_est,
    )(x, w_row, b_row)
    return out


if __name__ == "__main__":
    key = jax.random.PRNGKey(0)
    B = 8
    n_hid = 32

    # Deterministic example input: Linear(1, n_hid) acts on a trailing dim of 1.
    state = jax.random.normal(key, (B, 1), dtype=jnp.float32)

    # Parameters exactly as the module's init_weights(): constant 0.0.
    weight = jnp.zeros((n_hid, 1), dtype=jnp.float32)
    bias = jnp.zeros((n_hid,), dtype=jnp.float32)

    out = jax.block_until_ready(opt_network_forward(state, weight, bias))
    ref = state @ weight.T + bias
    assert out.shape == (B, n_hid)
    assert jnp.allclose(out, ref, atol=1e-6), "mismatch vs reference (zero params)"

    # Non-zero params to exercise the broadcast FMA path.
    k1, k2 = jax.random.split(key)
    w2 = jax.random.normal(k1, (n_hid, 1), dtype=jnp.float32)
    b2 = jax.random.normal(k2, (n_hid,), dtype=jnp.float32)
    out2 = jax.block_until_ready(opt_network_forward(state, w2, b2))
    ref2 = state @ w2.T + b2
    assert jnp.allclose(out2, ref2, atol=1e-5), "mismatch vs reference (nonzero params)"

    # Small ragged batch (B not a multiple of 8) — still a single full-dim block.
    state3 = jax.random.normal(k2, (37, 1), dtype=jnp.float32)
    out3 = jax.block_until_ready(opt_network_forward(state3, w2, b2))
    ref3 = state3 @ w2.T + b2
    assert out3.shape == (37, n_hid)
    assert jnp.allclose(out3, ref3, atol=1e-5), "mismatch vs reference (ragged batch)"

    print("KERNEL_OK")
</pallas_src>

<mosaic_0001>
module attributes {stable_mosaic.version = 11 : i64} {
  func.func @_linear_kernel(%arg0: i32, %arg1: memref<8x1xf32, #tpu.memory_space<vmem>>, %arg2: memref<1x32xf32, #tpu.memory_space<vmem>>, %arg3: memref<1x32xf32, #tpu.memory_space<vmem>>, %arg4: memref<8x32xf32, #tpu.memory_space<vmem>>) attributes {dimension_semantics = [#tpu.dimension_semantics<parallel>], iteration_bounds = array<i64: 1>, scalar_prefetch = 0 : i64, scratch_operands = 0 : i64, tpu.core_type = #tpu.core_type<tc>, window_params = [{transform_indices = @transform_0, window_bounds = array<i64: 8, 1>}, {pipeline_mode = #tpu.pipeline_mode<synchronous>, transform_indices = @transform_1, window_bounds = array<i64: 1, 32>}, {pipeline_mode = #tpu.pipeline_mode<synchronous>, transform_indices = @transform_2, window_bounds = array<i64: 1, 32>}, {transform_indices = @transform_3, window_bounds = array<i64: 8, 32>}]} {
    %c0 = arith.constant 0 : index
    %c0_0 = arith.constant 0 : index
    %0 = vector.load %arg1[%c0, %c0_0] : memref<8x1xf32, #tpu.memory_space<vmem>>, vector<8x1xf32>
    %c0_1 = arith.constant 0 : index
    %c0_2 = arith.constant 0 : index
    %1 = vector.load %arg2[%c0_1, %c0_2] : memref<1x32xf32, #tpu.memory_space<vmem>>, vector<1x32xf32>
    %2 = vector.broadcast %0 : vector<8x1xf32> to vector<8x32xf32>
    %3 = vector.broadcast %1 : vector<1x32xf32> to vector<8x32xf32>
    %4 = arith.mulf %2, %3 : vector<8x32xf32>
    %c0_3 = arith.constant 0 : index
    %c0_4 = arith.constant 0 : index
    %5 = vector.load %arg3[%c0_3, %c0_4] : memref<1x32xf32, #tpu.memory_space<vmem>>, vector<1x32xf32>
    %6 = vector.broadcast %5 : vector<1x32xf32> to vector<8x32xf32>
    %7 = arith.addf %4, %6 : vector<8x32xf32>
    %c0_5 = arith.constant 0 : index
    %c0_6 = arith.constant 0 : index
    %8 = vector.load %arg4[%c0_5, %c0_6] : memref<8x32xf32, #tpu.memory_space<vmem>>, vector<8x32xf32>
    tpu.vector_store %arg4[%c0_5, %c0_6], %7 {strides = array<i32>} : memref<8x32xf32, #tpu.memory_space<vmem>>, vector<8x32xf32>,
    return
  }
  func.func @transform_0(%arg0: i32) -> (i32, i32) {
    %c0_i32 = arith.constant 0 : i32
    %c0_i32_0 = arith.constant 0 : i32
    return %arg0, %c0_i32 : i32, i32
  }
  func.func @transform_1(%arg0: i32) -> (i32, i32) {
    %c0_i32 = arith.constant 0 : i32
    %c0_i32_0 = arith.constant 0 : i32
    %c0_i32_1 = arith.constant 0 : i32
    return %c0_i32, %c0_i32_0 : i32, i32
  }
  func.func @transform_2(%arg0: i32) -> (i32, i32) {
    %c0_i32 = arith.constant 0 : i32
    %c0_i32_0 = arith.constant 0 : i32
    %c0_i32_1 = arith.constant 0 : i32
    return %c0_i32, %c0_i32_0 : i32, i32
  }
  func.func @transform_3(%arg0: i32) -> (i32, i32) {
    %c0_i32 = arith.constant 0 : i32
    %c0_i32_0 = arith.constant 0 : i32
    return %arg0, %c0_i32 : i32, i32
  }
}

</mosaic_0001>

<llo_original>
// kernel: tpu_custom_call.1
$region0: #{tpu_custom_call.1}
  #allocation0 [shape = 'u32[]', space=smem, size = 0x4, offset = 0x4, fixed_abs, tag = 'smem constant byte address 0x4 - core index']
  #allocation1 [shape = 'u32[144,128]{1,0:T(1,128)}', space=vmem, size = 0x12000, scoped, tag = 'internal scratch']
  %s0 = inlined_call_operand.vmem [shape: f32[8,1], index: 0, kind: input, shape index: {}]
  %s1 = inlined_call_operand.vmem [shape: f32[1,32], index: 1, kind: input, shape index: {}]
  %s2 = inlined_call_operand.vmem [shape: f32[1,32], index: 2, kind: input, shape index: {}]
  %s3 = inlined_call_operand.hbm [shape: f32[8,32], index: 3, kind: output, shape index: {}]
  %s4 = sld [smem:[#allocation0]]
  $region22: #{tpu_custom_call.1} parent=0
    _
  %s6 = ssub.s32 1, %s4
  %s7 = scalar_select 0, %s6, %s4
  $region1: #{tpu_custom_call.1} parent=0
    #allocation2 [shape = 'u8[4096]{0}', space=vmem, size = 0x1000, scoped, tag = 'output window, operand 0, single buffered']
    #allocation3 [shape = 's32[1]{0}', space=sflag, size = 0x4, scoped, tag = 'scoped memory for tpu_custom_call.1']
    %8 = vsyncpa [#allocation3], 0
    // Predicated region
    $region2: #{tpu_custom_call.1} parent=1 // pred_check
      _
    $region3: #{tpu_custom_call.1} parent=1 // pred_check_branch
      %10 = sbr.rel (0) target = $region5
    $region4: #{tpu_custom_call.1} parent=1 // pred_region
      _
    $region5: #{tpu_custom_call.1} parent=1 // pred_fallthru
      _
    // Predicated region
    $region6: #{tpu_custom_call.1} parent=1 // pred_check
      _
    $region7: #{tpu_custom_call.1} parent=1 // pred_check_branch
      %12 = sbr.rel (0) target = $region9
    $region8: #{tpu_custom_call.1} parent=1 // pred_region
      _
    $region9: #{tpu_custom_call.1} parent=1 // pred_fallthru
      _
    // Predicated region
    $region10: #{tpu_custom_call.1} parent=1 // pred_check
      _
    $region11: #{tpu_custom_call.1} parent=1 // pred_check_branch
      %14 = sbr.rel (0) target = $region13
    $region12: #{tpu_custom_call.1} parent=1 // pred_region
      _
    $region13: #{tpu_custom_call.1} parent=1 // pred_fallthru
      _
    %v15 = vld [vmem:[%s0] sm:$0xff]
    %v16 = vld [vmem:[%s1] sm:$0x1]
    %18 = vset.pattern.permute.xlu0 0
    %19 = vperm.xlu0 %18, %v15
    %v20 = vpop.permute.xlu0 %19
    %v23 = vlaneseq
    %v24 = vshrl.u32 %v23, 7
    %v25 = vsub.s32 0, %v24
    %v26 = vrot.slane %v16, %v25
    %v28 = vmul.f32 %v20, %v26
    %v29 = vld [vmem:[%s2] sm:$0x1]
    %v31 = vlaneseq
    %v32 = vshrl.u32 %v31, 7
    %v33 = vsub.s32 0, %v32
    %v34 = vrot.slane %v29, %v33
    %v36 = vadd.f32 %v28, %v34
    %vm37 = vcmask 261120
    %38 = vst.msk [vmem:[#allocation2] sm:$0xff] %vm37, %v36
    // Predicated region
    $region14: #{tpu_custom_call.1} parent=1 // pred_check
      _
    $region15: #{tpu_custom_call.1} parent=1 // pred_check_branch
      %40 = sbr.rel (0) target = $region17
    $region16: #{tpu_custom_call.1} parent=1 // pred_region
      %s42 = ssub.s32 128, 128
      %43 = vsyncadd [#allocation3], %s42
      %s45 = sshll.u32 [#allocation2], 4
      %s46 = int_to_ptr.vmem [resolvable:$true] %s45
      %48 = dma.vmem_to_hbm [thread:$0]  %s46, 128, %s3, [#allocation3]
    $region17: #{tpu_custom_call.1} parent=1 // pred_fallthru
      _
    // Predicated region
    $region18: #{tpu_custom_call.1} parent=1 // pred_check
      _
    $region19: #{tpu_custom_call.1} parent=1 // pred_check_branch
      %50 = sbr.rel (0) target = $region21
    $region20: #{tpu_custom_call.1} parent=1 // pred_region
      %51 = dma.done [#allocation3], 128
    $region21: #{tpu_custom_call.1} parent=1 // pred_fallthru
      _
    %52 = vsyncpa [#allocation3], 1

</llo_original>
